<compile_context>
chip_gen: v7x
topology: tpu7x:2x2x1
jax: 0.10.0
libtpu: 0.0.40
codegen_flags: <defaults>
</compile_context>

<pallas_src>
import jax
import jax.numpy as jnp
from jax.experimental import pallas as pl
from jax.experimental.pallas import tpu as pltpu


def _add_kernel(a_ref, b_ref, o_ref):
    # Whole-tile elementwise add on VMEM-resident arrays (VPU hot path).
    o_ref[...] = a_ref[...] + b_ref[...]


def _lane_dense_factorization(total, sublane=8):
    """Pick (rows, cols) for a flat view of `total` elements so that rows is a
    multiple of the f32 sublane count (8) and cols (the lane dim) is as large
    as possible, keeping vregs lane-dense."""
    for rows in range(sublane, total + 1, sublane):
        if total % rows == 0:
            return rows, total // rows
    # Fallback: single row; block == full array dims, still legal.
    return 1, total


def _pallas_add(x258, x243):
    assert x258.shape == x243.shape and x258.dtype == x243.dtype
    orig_shape = x258.shape
    total = x258.size

    rows, cols = _lane_dense_factorization(total, sublane=8)

    # Pure metadata reshape of contiguous NCHW buffers (element order preserved;
    # irrelevant anyway for an elementwise add).
    a2 = x258.reshape(rows, cols)
    b2 = x243.reshape(rows, cols)

    vmem_spec = pl.BlockSpec(memory_space=pltpu.MemorySpace.VMEM)
    itemsize = jnp.dtype(x258.dtype).itemsize

    out2 = pl.pallas_call(
        _add_kernel,
        out_shape=jax.ShapeDtypeStruct((rows, cols), x258.dtype),
        in_specs=[vmem_spec, vmem_spec],
        out_specs=vmem_spec,
        # Output reuses input 0's buffer (x258 is dead after the skip add).
        input_output_aliases={0: 0},
        # Tiny-op hint so XLA doesn't schedule around an "opaque heavyweight".
        cost_estimate=pl.CostEstimate(
            flops=total,
            transcendentals=0,
            bytes_accessed=3 * total * itemsize,
        ),
    )(a2, b2)
    return out2.reshape(orig_shape)


# jit'd entry point; for the aliasing to avoid a defensive copy, callers can
# additionally donate x258 (donate_argnums=(0,)) at their own jit boundary.
pallas_add = jax.jit(_pallas_add)


if __name__ == "__main__":
    key = jax.random.PRNGKey(0)
    k1, k2 = jax.random.split(key)
    # Shapes exactly as in the module's forward: both [1, 136, 14, 14].
    x258 = jax.random.normal(k1, (1, 136, 14, 14), dtype=jnp.float32)
    x243 = jax.random.normal(k2, (1, 136, 14, 14), dtype=jnp.float32)

    # Reference (same semantics as torch operator.add), computed up front.
    ref = x258 + x243

    out = pallas_add(x258, x243)
    out = jax.block_until_ready(out)

    assert out.shape == (1, 136, 14, 14)
    assert out.dtype == jnp.float32
    assert jnp.allclose(out, ref, atol=1e-6, rtol=1e-6)
    print("KERNEL_OK")
</pallas_src>

<mosaic_0001>
module attributes {stable_mosaic.version = 11 : i64} {
  func.func @_add_kernel(%arg0: memref<8x3332xf32, #tpu.memory_space<vmem>>, %arg1: memref<8x3332xf32, #tpu.memory_space<vmem>>, %arg2: memref<8x3332xf32, #tpu.memory_space<vmem>>) attributes {dimension_semantics = [], scalar_prefetch = 0 : i64, scratch_operands = 0 : i64, tpu.core_type = #tpu.core_type<tc>} {
    %c0 = arith.constant 0 : index
    %c0_0 = arith.constant 0 : index
    %0 = vector.load %arg0[%c0, %c0_0] : memref<8x3332xf32, #tpu.memory_space<vmem>>, vector<8x3332xf32>
    %c0_1 = arith.constant 0 : index
    %c0_2 = arith.constant 0 : index
    %1 = vector.load %arg1[%c0_1, %c0_2] : memref<8x3332xf32, #tpu.memory_space<vmem>>, vector<8x3332xf32>
    %2 = arith.addf %0, %1 : vector<8x3332xf32>
    %c0_3 = arith.constant 0 : index
    %c0_4 = arith.constant 0 : index
    %3 = vector.load %arg2[%c0_3, %c0_4] : memref<8x3332xf32, #tpu.memory_space<vmem>>, vector<8x3332xf32>
    tpu.vector_store %arg2[%c0_3, %c0_4], %2 {strides = array<i32>} : memref<8x3332xf32, #tpu.memory_space<vmem>>, vector<8x3332xf32>,
    return
  }
}

</mosaic_0001>

<llo_original>
// kernel: _pallas_add.1
$region0: #{_pallas_add.1}
  #allocation0 [shape = 'u32[]', space=smem, size = 0x4, offset = 0x4, fixed_abs, tag = 'smem constant byte address 0x4 - core index']
  #allocation1 [shape = 'u32[144,128]{1,0:T(1,128)}', space=vmem, size = 0x12000, scoped, tag = 'internal scratch']
  %s0 = inlined_call_operand.vmem [shape: f32[8,3332], index: 0, kind: input, shape index: {}, may-alias: {0,2}]
  %s1 = inlined_call_operand.vmem [shape: f32[8,3332], index: 1, kind: input, shape index: {}]
  %s2 = inlined_call_operand.vmem [shape: f32[8,3332], index: 2, kind: output, shape index: {}, may-alias: {0,2}]
  %s3 = sld [smem:[#allocation0]]
  $region18: #{_pallas_add.1} parent=0
    _
  %s5 = ssub.s32 1, %s3
  %s6 = scalar_select 0, %s5, %s3
  // Predicated region
  $region2: #{_pallas_add.1} parent=0 // pred_check
    _
  $region3: #{_pallas_add.1} parent=0 // pred_check_branch
    %8 = sbr.rel (0) target = $region5
  $region4: #{_pallas_add.1} parent=0 // pred_region
    _
  $region5: #{_pallas_add.1} parent=0 // pred_fallthru
    _
  // Predicated region
  $region6: #{_pallas_add.1} parent=0 // pred_check
    _
  $region7: #{_pallas_add.1} parent=0 // pred_check_branch
    %10 = sbr.rel (0) target = $region9
  $region8: #{_pallas_add.1} parent=0 // pred_region
    _
  $region9: #{_pallas_add.1} parent=0 // pred_fallthru
    _
  %v11 = vld [vmem:[%s0] sm:$0xff]
  %v12 = vld [vmem:[%s0 + $0x8] sm:$0xff]
  %v13 = vld [vmem:[%s0 + $0x10] sm:$0xff]
  %v14 = vld [vmem:[%s0 + $0x18] sm:$0xff]
  %v15 = vld [vmem:[%s0 + $0x20] sm:$0xff]
  %v16 = vld [vmem:[%s0 + $0x28] sm:$0xff]
  %v17 = vld [vmem:[%s0 + $0x30] sm:$0xff]
  %v18 = vld [vmem:[%s0 + $0x38] sm:$0xff]
  %v19 = vld [vmem:[%s0 + $0x40] sm:$0xff]
  %v20 = vld [vmem:[%s0 + $0x48] sm:$0xff]
  %v21 = vld [vmem:[%s0 + $0x50] sm:$0xff]
  %v22 = vld [vmem:[%s0 + $0x58] sm:$0xff]
  %v23 = vld [vmem:[%s0 + $0x60] sm:$0xff]
  %v24 = vld [vmem:[%s0 + $0x68] sm:$0xff]
  %v25 = vld [vmem:[%s0 + $0x70] sm:$0xff]
  %v26 = vld [vmem:[%s0 + $0x78] sm:$0xff]
  %v27 = vld [vmem:[%s0 + $0x80] sm:$0xff]
  %v28 = vld [vmem:[%s0 + $0x88] sm:$0xff]
  %v29 = vld [vmem:[%s0 + $0x90] sm:$0xff]
  %v30 = vld [vmem:[%s0 + $0x98] sm:$0xff]
  %v31 = vld [vmem:[%s0 + $0xa0] sm:$0xff]
  %v32 = vld [vmem:[%s0 + $0xa8] sm:$0xff]
  %v33 = vld [vmem:[%s0 + $0xb0] sm:$0xff]
  %v34 = vld [vmem:[%s0 + $0xb8] sm:$0xff]
  %v35 = vld [vmem:[%s0 + $0xc0] sm:$0xff]
  %v36 = vld [vmem:[%s0 + $0xc8] sm:$0xff]
  %v37 = vld [vmem:[%s0 + $0xd0] sm:$0xff]
  %v38 = vld [vmem:[%s1] sm:$0xff]
  %v39 = vld [vmem:[%s1 + $0x8] sm:$0xff]
  %v40 = vld [vmem:[%s1 + $0x10] sm:$0xff]
  %v41 = vld [vmem:[%s1 + $0x18] sm:$0xff]
  %v42 = vld [vmem:[%s1 + $0x20] sm:$0xff]
  %v43 = vld [vmem:[%s1 + $0x28] sm:$0xff]
  %v44 = vld [vmem:[%s1 + $0x30] sm:$0xff]
  %v45 = vld [vmem:[%s1 + $0x38] sm:$0xff]
  %v46 = vld [vmem:[%s1 + $0x40] sm:$0xff]
  %v47 = vld [vmem:[%s1 + $0x48] sm:$0xff]
  %v48 = vld [vmem:[%s1 + $0x50] sm:$0xff]
  %v49 = vld [vmem:[%s1 + $0x58] sm:$0xff]
  %v50 = vld [vmem:[%s1 + $0x60] sm:$0xff]
  %v51 = vld [vmem:[%s1 + $0x68] sm:$0xff]
  %v52 = vld [vmem:[%s1 + $0x70] sm:$0xff]
  %v53 = vld [vmem:[%s1 + $0x78] sm:$0xff]
  %v54 = vld [vmem:[%s1 + $0x80] sm:$0xff]
  %v55 = vld [vmem:[%s1 + $0x88] sm:$0xff]
  %v56 = vld [vmem:[%s1 + $0x90] sm:$0xff]
  %v57 = vld [vmem:[%s1 + $0x98] sm:$0xff]
  %v58 = vld [vmem:[%s1 + $0xa0] sm:$0xff]
  %v59 = vld [vmem:[%s1 + $0xa8] sm:$0xff]
  %v60 = vld [vmem:[%s1 + $0xb0] sm:$0xff]
  %v61 = vld [vmem:[%s1 + $0xb8] sm:$0xff]
  %v62 = vld [vmem:[%s1 + $0xc0] sm:$0xff]
  %v63 = vld [vmem:[%s1 + $0xc8] sm:$0xff]
  %v64 = vld [vmem:[%s1 + $0xd0] sm:$0xff]
  %v65 = vadd.f32 %v11, %v38
  %v66 = vadd.f32 %v12, %v39
  %v67 = vadd.f32 %v13, %v40
  %v68 = vadd.f32 %v14, %v41
  %v69 = vadd.f32 %v15, %v42
  %v70 = vadd.f32 %v16, %v43
  %v71 = vadd.f32 %v17, %v44
  %v72 = vadd.f32 %v18, %v45
  %v73 = vadd.f32 %v19, %v46
  %v74 = vadd.f32 %v20, %v47
  %v75 = vadd.f32 %v21, %v48
  %v76 = vadd.f32 %v22, %v49
  %v77 = vadd.f32 %v23, %v50
  %v78 = vadd.f32 %v24, %v51
  %v79 = vadd.f32 %v25, %v52
  %v80 = vadd.f32 %v26, %v53
  %v81 = vadd.f32 %v27, %v54
  %v82 = vadd.f32 %v28, %v55
  %v83 = vadd.f32 %v29, %v56
  %v84 = vadd.f32 %v30, %v57
  %v85 = vadd.f32 %v31, %v58
  %v86 = vadd.f32 %v32, %v59
  %v87 = vadd.f32 %v33, %v60
  %v88 = vadd.f32 %v34, %v61
  %v89 = vadd.f32 %v35, %v62
  %v90 = vadd.f32 %v36, %v63
  %v91 = vadd.f32 %v37, %v64
  %92 = vst [vmem:[%s2] sm:$0xff] %v65
  %93 = vst [vmem:[%s2 + $0x8] sm:$0xff] %v66
  %94 = vst [vmem:[%s2 + $0x10] sm:$0xff] %v67
  %95 = vst [vmem:[%s2 + $0x18] sm:$0xff] %v68
  %96 = vst [vmem:[%s2 + $0x20] sm:$0xff] %v69
  %97 = vst [vmem:[%s2 + $0x28] sm:$0xff] %v70
  %98 = vst [vmem:[%s2 + $0x30] sm:$0xff] %v71
  %99 = vst [vmem:[%s2 + $0x38] sm:$0xff] %v72
  %100 = vst [vmem:[%s2 + $0x40] sm:$0xff] %v73
  %101 = vst [vmem:[%s2 + $0x48] sm:$0xff] %v74
  %102 = vst [vmem:[%s2 + $0x50] sm:$0xff] %v75
  %103 = vst [vmem:[%s2 + $0x58] sm:$0xff] %v76
  %104 = vst [vmem:[%s2 + $0x60] sm:$0xff] %v77
  %105 = vst [vmem:[%s2 + $0x68] sm:$0xff] %v78
  %106 = vst [vmem:[%s2 + $0x70] sm:$0xff] %v79
  %107 = vst [vmem:[%s2 + $0x78] sm:$0xff] %v80
  %108 = vst [vmem:[%s2 + $0x80] sm:$0xff] %v81
  %109 = vst [vmem:[%s2 + $0x88] sm:$0xff] %v82
  %110 = vst [vmem:[%s2 + $0x90] sm:$0xff] %v83
  %111 = vst [vmem:[%s2 + $0x98] sm:$0xff] %v84
  %112 = vst [vmem:[%s2 + $0xa0] sm:$0xff] %v85
  %113 = vst [vmem:[%s2 + $0xa8] sm:$0xff] %v86
  %114 = vst [vmem:[%s2 + $0xb0] sm:$0xff] %v87
  %115 = vst [vmem:[%s2 + $0xb8] sm:$0xff] %v88
  %116 = vst [vmem:[%s2 + $0xc0] sm:$0xff] %v89
  %117 = vst [vmem:[%s2 + $0xc8] sm:$0xff] %v90
  %vm118 = vcmask 31744
  %119 = vst.msk [vmem:[%s2 + $0xd0] sm:$0xff] %vm118, %v91
  // Predicated region
  $region10: #{_pallas_add.1} parent=0 // pred_check
    _
  $region11: #{_pallas_add.1} parent=0 // pred_check_branch
    %121 = sbr.rel (0) target = $region13
  $region12: #{_pallas_add.1} parent=0 // pred_region
    _
  $region13: #{_pallas_add.1} parent=0 // pred_fallthru
    _
  // Predicated region
  $region14: #{_pallas_add.1} parent=0 // pred_check
    _
  $region15: #{_pallas_add.1} parent=0 // pred_check_branch
    %123 = sbr.rel (0) target = $region17
  $region16: #{_pallas_add.1} parent=0 // pred_region
    _
  $region17: #{_pallas_add.1} parent=0 // pred_fallthru
    _

</llo_original>
